<compile_context>
chip_gen: v6e
topology: v6e:2x2x1
jax: 0.10.0
libtpu: 0.0.40
codegen_flags: <defaults>
</compile_context>

<pallas_src>
import jax
import jax.numpy as jnp
from jax.experimental import pallas as pl
from jax.experimental.pallas import tpu as pltpu

LANES = 128          # vreg lane width
SUBLANES = 8         # f32 sublane count
MIN_TILE_ROWS = LANES * SUBLANES   # 1024 batch rows -> one full (8,128) tile
NEG_SLOPE = 0.2


def _round_up(n, m):
    return (n + m - 1) // m * m


def mlp_kernel(x_ref, w1_ref, b1_ref, w2_ref, b2_ref, l1_ref, l2_ref):
    # x_ref:  (2, TR, 128) f32 in VMEM   (batch folded onto sublanes x lanes)
    # w1_ref: (6, 2)  f32 in SMEM        (PyTorch (out, in) layout)
    # b1_ref: (6,)    f32 in SMEM
    # w2_ref: (3, 6)  f32 in SMEM
    # b2_ref: (3,)    f32 in SMEM
    # l1_ref: (6, TR, 128), l2_ref: (3, TR, 128)
    x0 = x_ref[0]                      # (TR, 128)
    x1 = x_ref[1]                      # (TR, 128)

    # fc1 + leaky_relu: 6 output planes, 2 FMAs each (all on the VPU).
    h = []
    for j in range(6):
        l1_j = w1_ref[j, 0] * x0 + w1_ref[j, 1] * x1 + b1_ref[j]
        l1_ref[j] = l1_j                               # dense (TR,128) store
        h.append(jnp.where(l1_j > 0.0, l1_j, NEG_SLOPE * l1_j))

    # fc2: 3 output planes, 6 FMAs each.
    for i in range(3):
        acc = w2_ref[i, 0] * h[0] + b2_ref[i]
        for k in range(1, 6):
            acc = acc + w2_ref[i, k] * h[k]
        l2_ref[i] = acc                                # dense (TR,128) store


def mlp_forward(x, w1, b1, w2, b2, *, max_block_rows=8192):
    """x: (B, 2); w1: (6, 2); b1: (6,); w2: (3, 6); b2: (3,)  (PyTorch layouts).

    Returns (l1, l2) with shapes (B, 6) and (B, 3), matching MLP.forward.
    """
    x = jnp.asarray(x, jnp.float32)
    w1 = jnp.asarray(w1, jnp.float32)
    b1 = jnp.asarray(b1, jnp.float32)
    w2 = jnp.asarray(w2, jnp.float32)
    b2 = jnp.asarray(b2, jnp.float32)

    B = x.shape[0]
    # Batch tile: multiple of 1024 rows (one full (8,128) f32 tile), capped so
    # the double-buffered working set stays tiny even on v7x's 64 MiB VMEM.
    tile = min(_round_up(max_block_rows, MIN_TILE_ROWS),
               _round_up(B, MIN_TILE_ROWS))
    b_pad = _round_up(B, tile)
    r_total = b_pad // LANES           # folded sublane-rows in the whole batch
    tr = tile // LANES                 # folded sublane-rows per block (mult of 8)
    grid = (b_pad // tile,)

    # Wrapper-side layout plumbing: pad batch, put it on the lane/sublane axes.
    x_pad = jnp.pad(x, ((0, b_pad - B), (0, 0)))       # (b_pad, 2)
    x_t = x_pad.T.reshape(2, r_total, LANES)           # (2, R, 128)

    smem_spec = pl.BlockSpec(memory_space=pltpu.SMEM)

    l1_t, l2_t = pl.pallas_call(
        mlp_kernel,
        out_shape=(
            jax.ShapeDtypeStruct((6, r_total, LANES), jnp.float32),
            jax.ShapeDtypeStruct((3, r_total, LANES), jnp.float32),
        ),
        grid=grid,
        in_specs=[
            pl.BlockSpec((2, tr, LANES), lambda i: (0, i, 0)),
            smem_spec,   # w1
            smem_spec,   # b1
            smem_spec,   # w2
            smem_spec,   # b2
        ],
        out_specs=(
            pl.BlockSpec((6, tr, LANES), lambda i: (0, i, 0)),
            pl.BlockSpec((3, tr, LANES), lambda i: (0, i, 0)),
        ),
        compiler_params=pltpu.CompilerParams(
            dimension_semantics=("parallel",),
        ),
    )(x_t, w1, b1, w2, b2)

    # Back to PyTorch's (B, features) layout; drop batch padding.
    l1 = l1_t.reshape(6, b_pad).T[:B]
    l2 = l2_t.reshape(3, b_pad).T[:B]
    return l1, l2


def init_params(key):
    """Deterministic init mimicking PyTorch's default nn.Linear init
    (uniform in [-1/sqrt(fan_in), 1/sqrt(fan_in)])."""
    k1, k2, k3, k4 = jax.random.split(key, 4)
    bound1 = 1.0 / jnp.sqrt(2.0)
    bound2 = 1.0 / jnp.sqrt(6.0)
    w1 = jax.random.uniform(k1, (6, 2), jnp.float32, -bound1, bound1)  # (out, in)
    b1 = jax.random.uniform(k2, (6,), jnp.float32, -bound1, bound1)
    w2 = jax.random.uniform(k3, (3, 6), jnp.float32, -bound2, bound2)
    b2 = jax.random.uniform(k4, (3,), jnp.float32, -bound2, bound2)
    return w1, b1, w2, b2


def _reference(x, w1, b1, w2, b2):
    l1 = x @ w1.T + b1
    l2 = jnp.where(l1 > 0, l1, NEG_SLOPE * l1) @ w2.T + b2
    return l1, l2


if __name__ == "__main__":
    key = jax.random.PRNGKey(0)
    pkey, xkey = jax.random.split(key)
    w1, b1, w2, b2 = init_params(pkey)

    # Small batch, 2 features (fc1 expects in_features=2).
    x = jax.random.normal(xkey, (8, 2), jnp.float32)
    l1, l2 = mlp_forward(x, w1, b1, w2, b2)
    jax.block_until_ready((l1, l2))

    l1_ref, l2_ref = _reference(x, w1, b1, w2, b2)
    assert l1.shape == (8, 6) and l2.shape == (8, 3)
    assert jnp.allclose(l1, l1_ref, atol=1e-5), "l1 mismatch"
    assert jnp.allclose(l2, l2_ref, atol=1e-5), "l2 mismatch"

    # Larger, non-aligned batch to exercise the multi-step parallel grid path.
    xb = jax.random.normal(jax.random.PRNGKey(1), (2500, 2), jnp.float32)
    l1b, l2b = mlp_forward(xb, w1, b1, w2, b2, max_block_rows=1024)
    jax.block_until_ready((l1b, l2b))
    l1b_ref, l2b_ref = _reference(xb, w1, b1, w2, b2)
    assert jnp.allclose(l1b, l1b_ref, atol=1e-5), "l1 (grid) mismatch"
    assert jnp.allclose(l2b, l2b_ref, atol=1e-5), "l2 (grid) mismatch"

    print("KERNEL_OK")
</pallas_src>

<mosaic_0001>
module attributes {stable_mosaic.version = 11 : i64} {
  func.func @mlp_kernel(%arg0: i32, %arg1: memref<2x8x128xf32, #tpu.memory_space<vmem>>, %arg2: memref<6x2xf32, #tpu.memory_space<smem>>, %arg3: memref<6xf32, #tpu.memory_space<smem>>, %arg4: memref<3x6xf32, #tpu.memory_space<smem>>, %arg5: memref<3xf32, #tpu.memory_space<smem>>, %arg6: memref<6x8x128xf32, #tpu.memory_space<vmem>>, %arg7: memref<3x8x128xf32, #tpu.memory_space<vmem>>) attributes {dimension_semantics = [#tpu.dimension_semantics<parallel>], iteration_bounds = array<i64: 1>, scalar_prefetch = 0 : i64, scratch_operands = 0 : i64, tpu.core_type = #tpu.core_type<tc>, window_params = [{transform_indices = @transform_0, window_bounds = array<i64: 2, 8, 128>}, {transform_indices = @transform_1, window_bounds = array<i64: 6, 2>}, {transform_indices = @transform_2, window_bounds = array<i64: 6>}, {transform_indices = @transform_3, window_bounds = array<i64: 3, 6>}, {transform_indices = @transform_4, window_bounds = array<i64: 3>}, {transform_indices = @transform_5, window_bounds = array<i64: 6, 8, 128>}, {transform_indices = @transform_6, window_bounds = array<i64: 3, 8, 128>}]} {
    %c0 = arith.constant 0 : index
    %c0_0 = arith.constant 0 : index
    %c0_1 = arith.constant 0 : index
    %0 = vector.load %arg1[%c0, %c0_0, %c0_1] : memref<2x8x128xf32, #tpu.memory_space<vmem>>, vector<1x8x128xf32>
    %1 = vector.shape_cast %0 : vector<1x8x128xf32> to vector<8x128xf32>
    %c1 = arith.constant 1 : index
    %c0_2 = arith.constant 0 : index
    %c0_3 = arith.constant 0 : index
    %2 = vector.load %arg1[%c1, %c0_2, %c0_3] : memref<2x8x128xf32, #tpu.memory_space<vmem>>, vector<1x8x128xf32>
    %3 = vector.shape_cast %2 : vector<1x8x128xf32> to vector<8x128xf32>
    %c0_4 = arith.constant 0 : index
    %c0_5 = arith.constant 0 : index
    %4 = memref.load %arg2[%c0_4, %c0_5] : memref<6x2xf32, #tpu.memory_space<smem>>
    %5 = vector.broadcast %4 : f32 to vector<8x128xf32>
    %6 = arith.mulf %5, %1 : vector<8x128xf32>
    %c0_6 = arith.constant 0 : index
    %c1_7 = arith.constant 1 : index
    %7 = memref.load %arg2[%c0_6, %c1_7] : memref<6x2xf32, #tpu.memory_space<smem>>
    %8 = vector.broadcast %7 : f32 to vector<8x128xf32>
    %9 = arith.mulf %8, %3 : vector<8x128xf32>
    %10 = arith.addf %6, %9 : vector<8x128xf32>
    %c0_8 = arith.constant 0 : index
    %11 = memref.load %arg3[%c0_8] : memref<6xf32, #tpu.memory_space<smem>>
    %12 = vector.broadcast %11 : f32 to vector<8x128xf32>
    %13 = arith.addf %10, %12 : vector<8x128xf32>
    %c0_9 = arith.constant 0 : index
    %c0_10 = arith.constant 0 : index
    %c0_11 = arith.constant 0 : index
    %14 = vector.load %arg6[%c0_9, %c0_10, %c0_11] : memref<6x8x128xf32, #tpu.memory_space<vmem>>, vector<1x8x128xf32>
    %15 = vector.shape_cast %14 : vector<1x8x128xf32> to vector<8x128xf32>
    %16 = vector.shape_cast %13 : vector<8x128xf32> to vector<1x8x128xf32>
    tpu.vector_store %arg6[%c0_9, %c0_10, %c0_11], %16 {strides = array<i32>} : memref<6x8x128xf32, #tpu.memory_space<vmem>>, vector<1x8x128xf32>,
    %cst = arith.constant 0.000000e+00 : f32
    %17 = vector.broadcast %cst : f32 to vector<8x128xf32>
    %18 = arith.cmpf ogt, %13, %17 : vector<8x128xf32>
    %cst_12 = arith.constant 2.000000e-01 : f32
    %19 = vector.broadcast %cst_12 : f32 to vector<8x128xf32>
    %20 = arith.mulf %19, %13 : vector<8x128xf32>
    %21 = arith.select %18, %13, %20 : vector<8x128xi1>, vector<8x128xf32>
    %c1_13 = arith.constant 1 : index
    %c0_14 = arith.constant 0 : index
    %22 = memref.load %arg2[%c1_13, %c0_14] : memref<6x2xf32, #tpu.memory_space<smem>>
    %23 = vector.broadcast %22 : f32 to vector<8x128xf32>
    %24 = arith.mulf %23, %1 : vector<8x128xf32>
    %c1_15 = arith.constant 1 : index
    %c1_16 = arith.constant 1 : index
    %25 = memref.load %arg2[%c1_15, %c1_16] : memref<6x2xf32, #tpu.memory_space<smem>>
    %26 = vector.broadcast %25 : f32 to vector<8x128xf32>
    %27 = arith.mulf %26, %3 : vector<8x128xf32>
    %28 = arith.addf %24, %27 : vector<8x128xf32>
    %c1_17 = arith.constant 1 : index
    %29 = memref.load %arg3[%c1_17] : memref<6xf32, #tpu.memory_space<smem>>
    %30 = vector.broadcast %29 : f32 to vector<8x128xf32>
    %31 = arith.addf %28, %30 : vector<8x128xf32>
    %c1_18 = arith.constant 1 : index
    %c0_19 = arith.constant 0 : index
    %c0_20 = arith.constant 0 : index
    %32 = vector.load %arg6[%c1_18, %c0_19, %c0_20] : memref<6x8x128xf32, #tpu.memory_space<vmem>>, vector<1x8x128xf32>
    %33 = vector.shape_cast %32 : vector<1x8x128xf32> to vector<8x128xf32>
    %34 = vector.shape_cast %31 : vector<8x128xf32> to vector<1x8x128xf32>
    tpu.vector_store %arg6[%c1_18, %c0_19, %c0_20], %34 {strides = array<i32>} : memref<6x8x128xf32, #tpu.memory_space<vmem>>, vector<1x8x128xf32>,
    %cst_21 = arith.constant 0.000000e+00 : f32
    %35 = vector.broadcast %cst_21 : f32 to vector<8x128xf32>
    %36 = arith.cmpf ogt, %31, %35 : vector<8x128xf32>
    %cst_22 = arith.constant 2.000000e-01 : f32
    %37 = vector.broadcast %cst_22 : f32 to vector<8x128xf32>
    %38 = arith.mulf %37, %31 : vector<8x128xf32>
    %39 = arith.select %36, %31, %38 : vector<8x128xi1>, vector<8x128xf32>
    %c2 = arith.constant 2 : index
    %c0_23 = arith.constant 0 : index
    %40 = memref.load %arg2[%c2, %c0_23] : memref<6x2xf32, #tpu.memory_space<smem>>
    %41 = vector.broadcast %40 : f32 to vector<8x128xf32>
    %42 = arith.mulf %41, %1 : vector<8x128xf32>
    %c2_24 = arith.constant 2 : index
    %c1_25 = arith.constant 1 : index
    %43 = memref.load %arg2[%c2_24, %c1_25] : memref<6x2xf32, #tpu.memory_space<smem>>
    %44 = vector.broadcast %43 : f32 to vector<8x128xf32>
    %45 = arith.mulf %44, %3 : vector<8x128xf32>
    %46 = arith.addf %42, %45 : vector<8x128xf32>
    %c2_26 = arith.constant 2 : index
    %47 = memref.load %arg3[%c2_26] : memref<6xf32, #tpu.memory_space<smem>>
    %48 = vector.broadcast %47 : f32 to vector<8x128xf32>
    %49 = arith.addf %46, %48 : vector<8x128xf32>
    %c2_27 = arith.constant 2 : index
    %c0_28 = arith.constant 0 : index
    %c0_29 = arith.constant 0 : index
    %50 = vector.load %arg6[%c2_27, %c0_28, %c0_29] : memref<6x8x128xf32, #tpu.memory_space<vmem>>, vector<1x8x128xf32>
    %51 = vector.shape_cast %50 : vector<1x8x128xf32> to vector<8x128xf32>
    %52 = vector.shape_cast %49 : vector<8x128xf32> to vector<1x8x128xf32>
    tpu.vector_store %arg6[%c2_27, %c0_28, %c0_29], %52 {strides = array<i32>} : memref<6x8x128xf32, #tpu.memory_space<vmem>>, vector<1x8x128xf32>,
    %cst_30 = arith.constant 0.000000e+00 : f32
    %53 = vector.broadcast %cst_30 : f32 to vector<8x128xf32>
    %54 = arith.cmpf ogt, %49, %53 : vector<8x128xf32>
    %cst_31 = arith.constant 2.000000e-01 : f32
    %55 = vector.broadcast %cst_31 : f32 to vector<8x128xf32>
    %56 = arith.mulf %55, %49 : vector<8x128xf32>
    %57 = arith.select %54, %49, %56 : vector<8x128xi1>, vector<8x128xf32>
    %c3 = arith.constant 3 : index
    %c0_32 = arith.constant 0 : index
    %58 = memref.load %arg2[%c3, %c0_32] : memref<6x2xf32, #tpu.memory_space<smem>>
    %59 = vector.broadcast %58 : f32 to vector<8x128xf32>
    %60 = arith.mulf %59, %1 : vector<8x128xf32>
    %c3_33 = arith.constant 3 : index
    %c1_34 = arith.constant 1 : index
    %61 = memref.load %arg2[%c3_33, %c1_34] : memref<6x2xf32, #tpu.memory_space<smem>>
    %62 = vector.broadcast %61 : f32 to vector<8x128xf32>
    %63 = arith.mulf %62, %3 : vector<8x128xf32>
    %64 = arith.addf %60, %63 : vector<8x128xf32>
    %c3_35 = arith.constant 3 : index
    %65 = memref.load %arg3[%c3_35] : memref<6xf32, #tpu.memory_space<smem>>
    %66 = vector.broadcast %65 : f32 to vector<8x128xf32>
    %67 = arith.addf %64, %66 : vector<8x128xf32>
    %c3_36 = arith.constant 3 : index
    %c0_37 = arith.constant 0 : index
    %c0_38 = arith.constant 0 : index
    %68 = vector.load %arg6[%c3_36, %c0_37, %c0_38] : memref<6x8x128xf32, #tpu.memory_space<vmem>>, vector<1x8x128xf32>
    %69 = vector.shape_cast %68 : vector<1x8x128xf32> to vector<8x128xf32>
    %70 = vector.shape_cast %67 : vector<8x128xf32> to vector<1x8x128xf32>
    tpu.vector_store %arg6[%c3_36, %c0_37, %c0_38], %70 {strides = array<i32>} : memref<6x8x128xf32, #tpu.memory_space<vmem>>, vector<1x8x128xf32>,
    %cst_39 = arith.constant 0.000000e+00 : f32
    %71 = vector.broadcast %cst_39 : f32 to vector<8x128xf32>
    %72 = arith.cmpf ogt, %67, %71 : vector<8x128xf32>
    %cst_40 = arith.constant 2.000000e-01 : f32
    %73 = vector.broadcast %cst_40 : f32 to vector<8x128xf32>
    %74 = arith.mulf %73, %67 : vector<8x128xf32>
    %75 = arith.select %72, %67, %74 : vector<8x128xi1>, vector<8x128xf32>
    %c4 = arith.constant 4 : index
    %c0_41 = arith.constant 0 : index
    %76 = memref.load %arg2[%c4, %c0_41] : memref<6x2xf32, #tpu.memory_space<smem>>
    %77 = vector.broadcast %76 : f32 to vector<8x128xf32>
    %78 = arith.mulf %77, %1 : vector<8x128xf32>
    %c4_42 = arith.constant 4 : index
    %c1_43 = arith.constant 1 : index
    %79 = memref.load %arg2[%c4_42, %c1_43] : memref<6x2xf32, #tpu.memory_space<smem>>
    %80 = vector.broadcast %79 : f32 to vector<8x128xf32>
    %81 = arith.mulf %80, %3 : vector<8x128xf32>
    %82 = arith.addf %78, %81 : vector<8x128xf32>
    %c4_44 = arith.constant 4 : index
    %83 = memref.load %arg3[%c4_44] : memref<6xf32, #tpu.memory_space<smem>>
    %84 = vector.broadcast %83 : f32 to vector<8x128xf32>
    %85 = arith.addf %82, %84 : vector<8x128xf32>
    %c4_45 = arith.constant 4 : index
    %c0_46 = arith.constant 0 : index
    %c0_47 = arith.constant 0 : index
    %86 = vector.load %arg6[%c4_45, %c0_46, %c0_47] : memref<6x8x128xf32, #tpu.memory_space<vmem>>, vector<1x8x128xf32>
    %87 = vector.shape_cast %86 : vector<1x8x128xf32> to vector<8x128xf32>
    %88 = vector.shape_cast %85 : vector<8x128xf32> to vector<1x8x128xf32>
    tpu.vector_store %arg6[%c4_45, %c0_46, %c0_47], %88 {strides = array<i32>} : memref<6x8x128xf32, #tpu.memory_space<vmem>>, vector<1x8x128xf32>,
    %cst_48 = arith.constant 0.000000e+00 : f32
    %89 = vector.broadcast %cst_48 : f32 to vector<8x128xf32>
    %90 = arith.cmpf ogt, %85, %89 : vector<8x128xf32>
    %cst_49 = arith.constant 2.000000e-01 : f32
    %91 = vector.broadcast %cst_49 : f32 to vector<8x128xf32>
    %92 = arith.mulf %91, %85 : vector<8x128xf32>
    %93 = arith.select %90, %85, %92 : vector<8x128xi1>, vector<8x128xf32>
    %c5 = arith.constant 5 : index
    %c0_50 = arith.constant 0 : index
    %94 = memref.load %arg2[%c5, %c0_50] : memref<6x2xf32, #tpu.memory_space<smem>>
    %95 = vector.broadcast %94 : f32 to vector<8x128xf32>
    %96 = arith.mulf %95, %1 : vector<8x128xf32>
    %c5_51 = arith.constant 5 : index
    %c1_52 = arith.constant 1 : index
    %97 = memref.load %arg2[%c5_51, %c1_52] : memref<6x2xf32, #tpu.memory_space<smem>>
    %98 = vector.broadcast %97 : f32 to vector<8x128xf32>
    %99 = arith.mulf %98, %3 : vector<8x128xf32>
    %100 = arith.addf %96, %99 : vector<8x128xf32>
    %c5_53 = arith.constant 5 : index
    %101 = memref.load %arg3[%c5_53] : memref<6xf32, #tpu.memory_space<smem>>
    %102 = vector.broadcast %101 : f32 to vector<8x128xf32>
    %103 = arith.addf %100, %102 : vector<8x128xf32>
    %c5_54 = arith.constant 5 : index
    %c0_55 = arith.constant 0 : index
    %c0_56 = arith.constant 0 : index
    %104 = vector.load %arg6[%c5_54, %c0_55, %c0_56] : memref<6x8x128xf32, #tpu.memory_space<vmem>>, vector<1x8x128xf32>
    %105 = vector.shape_cast %104 : vector<1x8x128xf32> to vector<8x128xf32>
    %106 = vector.shape_cast %103 : vector<8x128xf32> to vector<1x8x128xf32>
    tpu.vector_store %arg6[%c5_54, %c0_55, %c0_56], %106 {strides = array<i32>} : memref<6x8x128xf32, #tpu.memory_space<vmem>>, vector<1x8x128xf32>,
    %cst_57 = arith.constant 0.000000e+00 : f32
    %107 = vector.broadcast %cst_57 : f32 to vector<8x128xf32>
    %108 = arith.cmpf ogt, %103, %107 : vector<8x128xf32>
    %cst_58 = arith.constant 2.000000e-01 : f32
    %109 = vector.broadcast %cst_58 : f32 to vector<8x128xf32>
    %110 = arith.mulf %109, %103 : vector<8x128xf32>
    %111 = arith.select %108, %103, %110 : vector<8x128xi1>, vector<8x128xf32>
    %c0_59 = arith.constant 0 : index
    %c0_60 = arith.constant 0 : index
    %112 = memref.load %arg4[%c0_59, %c0_60] : memref<3x6xf32, #tpu.memory_space<smem>>
    %113 = vector.broadcast %112 : f32 to vector<8x128xf32>
    %114 = arith.mulf %113, %21 : vector<8x128xf32>
    %c0_61 = arith.constant 0 : index
    %115 = memref.load %arg5[%c0_61] : memref<3xf32, #tpu.memory_space<smem>>
    %116 = vector.broadcast %115 : f32 to vector<8x128xf32>
    %117 = arith.addf %114, %116 : vector<8x128xf32>
    %c0_62 = arith.constant 0 : index
    %c1_63 = arith.constant 1 : index
    %118 = memref.load %arg4[%c0_62, %c1_63] : memref<3x6xf32, #tpu.memory_space<smem>>
    %119 = vector.broadcast %118 : f32 to vector<8x128xf32>
    %120 = arith.mulf %119, %39 : vector<8x128xf32>
    %121 = arith.addf %117, %120 : vector<8x128xf32>
    %c0_64 = arith.constant 0 : index
    %c2_65 = arith.constant 2 : index
    %122 = memref.load %arg4[%c0_64, %c2_65] : memref<3x6xf32, #tpu.memory_space<smem>>
    %123 = vector.broadcast %122 : f32 to vector<8x128xf32>
    %124 = arith.mulf %123, %57 : vector<8x128xf32>
    %125 = arith.addf %121, %124 : vector<8x128xf32>
    %c0_66 = arith.constant 0 : index
    %c3_67 = arith.constant 3 : index
    %126 = memref.load %arg4[%c0_66, %c3_67] : memref<3x6xf32, #tpu.memory_space<smem>>
    %127 = vector.broadcast %126 : f32 to vector<8x128xf32>
    %128 = arith.mulf %127, %75 : vector<8x128xf32>
    %129 = arith.addf %125, %128 : vector<8x128xf32>
    %c0_68 = arith.constant 0 : index
    %c4_69 = arith.constant 4 : index
    %130 = memref.load %arg4[%c0_68, %c4_69] : memref<3x6xf32, #tpu.memory_space<smem>>
    %131 = vector.broadcast %130 : f32 to vector<8x128xf32>
    %132 = arith.mulf %131, %93 : vector<8x128xf32>
    %133 = arith.addf %129, %132 : vector<8x128xf32>
    %c0_70 = arith.constant 0 : index
    %c5_71 = arith.constant 5 : index
    %134 = memref.load %arg4[%c0_70, %c5_71] : memref<3x6xf32, #tpu.memory_space<smem>>
    %135 = vector.broadcast %134 : f32 to vector<8x128xf32>
    %136 = arith.mulf %135, %111 : vector<8x128xf32>
    %137 = arith.addf %133, %136 : vector<8x128xf32>
    %c0_72 = arith.constant 0 : index
    %c0_73 = arith.constant 0 : index
    %c0_74 = arith.constant 0 : index
    %138 = vector.load %arg7[%c0_72, %c0_73, %c0_74] : memref<3x8x128xf32, #tpu.memory_space<vmem>>, vector<1x8x128xf32>
    %139 = vector.shape_cast %138 : vector<1x8x128xf32> to vector<8x128xf32>
    %140 = vector.shape_cast %137 : vector<8x128xf32> to vector<1x8x128xf32>
    tpu.vector_store %arg7[%c0_72, %c0_73, %c0_74], %140 {strides = array<i32>} : memref<3x8x128xf32, #tpu.memory_space<vmem>>, vector<1x8x128xf32>,
    %c1_75 = arith.constant 1 : index
    %c0_76 = arith.constant 0 : index
    %141 = memref.load %arg4[%c1_75, %c0_76] : memref<3x6xf32, #tpu.memory_space<smem>>
    %142 = vector.broadcast %141 : f32 to vector<8x128xf32>
    %143 = arith.mulf %142, %21 : vector<8x128xf32>
    %c1_77 = arith.constant 1 : index
    %144 = memref.load %arg5[%c1_77] : memref<3xf32, #tpu.memory_space<smem>>
    %145 = vector.broadcast %144 : f32 to vector<8x128xf32>
    %146 = arith.addf %143, %145 : vector<8x128xf32>
    %c1_78 = arith.constant 1 : index
    %c1_79 = arith.constant 1 : index
    %147 = memref.load %arg4[%c1_78, %c1_79] : memref<3x6xf32, #tpu.memory_space<smem>>
    %148 = vector.broadcast %147 : f32 to vector<8x128xf32>
    %149 = arith.mulf %148, %39 : vector<8x128xf32>
    %150 = arith.addf %146, %149 : vector<8x128xf32>
    %c1_80 = arith.constant 1 : index
    %c2_81 = arith.constant 2 : index
    %151 = memref.load %arg4[%c1_80, %c2_81] : memref<3x6xf32, #tpu.memory_space<smem>>
    %152 = vector.broadcast %151 : f32 to vector<8x128xf32>
    %153 = arith.mulf %152, %57 : vector<8x128xf32>
    %154 = arith.addf %150, %153 : vector<8x128xf32>
    %c1_82 = arith.constant 1 : index
    %c3_83 = arith.constant 3 : index
    %155 = memref.load %arg4[%c1_82, %c3_83] : memref<3x6xf32, #tpu.memory_space<smem>>
    %156 = vector.broadcast %155 : f32 to vector<8x128xf32>
    %157 = arith.mulf %156, %75 : vector<8x128xf32>
    %158 = arith.addf %154, %157 : vector<8x128xf32>
    %c1_84 = arith.constant 1 : index
    %c4_85 = arith.constant 4 : index
    %159 = memref.load %arg4[%c1_84, %c4_85] : memref<3x6xf32, #tpu.memory_space<smem>>
    %160 = vector.broadcast %159 : f32 to vector<8x128xf32>
    %161 = arith.mulf %160, %93 : vector<8x128xf32>
    %162 = arith.addf %158, %161 : vector<8x128xf32>
    %c1_86 = arith.constant 1 : index
    %c5_87 = arith.constant 5 : index
    %163 = memref.load %arg4[%c1_86, %c5_87] : memref<3x6xf32, #tpu.memory_space<smem>>
    %164 = vector.broadcast %163 : f32 to vector<8x128xf32>
    %165 = arith.mulf %164, %111 : vector<8x128xf32>
    %166 = arith.addf %162, %165 : vector<8x128xf32>
    %c1_88 = arith.constant 1 : index
    %c0_89 = arith.constant 0 : index
    %c0_90 = arith.constant 0 : index
    %167 = vector.load %arg7[%c1_88, %c0_89, %c0_90] : memref<3x8x128xf32, #tpu.memory_space<vmem>>, vector<1x8x128xf32>
    %168 = vector.shape_cast %167 : vector<1x8x128xf32> to vector<8x128xf32>
    %169 = vector.shape_cast %166 : vector<8x128xf32> to vector<1x8x128xf32>
    tpu.vector_store %arg7[%c1_88, %c0_89, %c0_90], %169 {strides = array<i32>} : memref<3x8x128xf32, #tpu.memory_space<vmem>>, vector<1x8x128xf32>,
    %c2_91 = arith.constant 2 : index
    %c0_92 = arith.constant 0 : index
    %170 = memref.load %arg4[%c2_91, %c0_92] : memref<3x6xf32, #tpu.memory_space<smem>>
    %171 = vector.broadcast %170 : f32 to vector<8x128xf32>
    %172 = arith.mulf %171, %21 : vector<8x128xf32>
    %c2_93 = arith.constant 2 : index
    %173 = memref.load %arg5[%c2_93] : memref<3xf32, #tpu.memory_space<smem>>
    %174 = vector.broadcast %173 : f32 to vector<8x128xf32>
    %175 = arith.addf %172, %174 : vector<8x128xf32>
    %c2_94 = arith.constant 2 : index
    %c1_95 = arith.constant 1 : index
    %176 = memref.load %arg4[%c2_94, %c1_95] : memref<3x6xf32, #tpu.memory_space<smem>>
    %177 = vector.broadcast %176 : f32 to vector<8x128xf32>
    %178 = arith.mulf %177, %39 : vector<8x128xf32>
    %179 = arith.addf %175, %178 : vector<8x128xf32>
    %c2_96 = arith.constant 2 : index
    %c2_97 = arith.constant 2 : index
    %180 = memref.load %arg4[%c2_96, %c2_97] : memref<3x6xf32, #tpu.memory_space<smem>>
    %181 = vector.broadcast %180 : f32 to vector<8x128xf32>
    %182 = arith.mulf %181, %57 : vector<8x128xf32>
    %183 = arith.addf %179, %182 : vector<8x128xf32>
    %c2_98 = arith.constant 2 : index
    %c3_99 = arith.constant 3 : index
    %184 = memref.load %arg4[%c2_98, %c3_99] : memref<3x6xf32, #tpu.memory_space<smem>>
    %185 = vector.broadcast %184 : f32 to vector<8x128xf32>
    %186 = arith.mulf %185, %75 : vector<8x128xf32>
    %187 = arith.addf %183, %186 : vector<8x128xf32>
    %c2_100 = arith.constant 2 : index
    %c4_101 = arith.constant 4 : index
    %188 = memref.load %arg4[%c2_100, %c4_101] : memref<3x6xf32, #tpu.memory_space<smem>>
    %189 = vector.broadcast %188 : f32 to vector<8x128xf32>
    %190 = arith.mulf %189, %93 : vector<8x128xf32>
    %191 = arith.addf %187, %190 : vector<8x128xf32>
    %c2_102 = arith.constant 2 : index
    %c5_103 = arith.constant 5 : index
    %192 = memref.load %arg4[%c2_102, %c5_103] : memref<3x6xf32, #tpu.memory_space<smem>>
    %193 = vector.broadcast %192 : f32 to vector<8x128xf32>
    %194 = arith.mulf %193, %111 : vector<8x128xf32>
    %195 = arith.addf %191, %194 : vector<8x128xf32>
    %c2_104 = arith.constant 2 : index
    %c0_105 = arith.constant 0 : index
    %c0_106 = arith.constant 0 : index
    %196 = vector.load %arg7[%c2_104, %c0_105, %c0_106] : memref<3x8x128xf32, #tpu.memory_space<vmem>>, vector<1x8x128xf32>
    %197 = vector.shape_cast %196 : vector<1x8x128xf32> to vector<8x128xf32>
    %198 = vector.shape_cast %195 : vector<8x128xf32> to vector<1x8x128xf32>
    tpu.vector_store %arg7[%c2_104, %c0_105, %c0_106], %198 {strides = array<i32>} : memref<3x8x128xf32, #tpu.memory_space<vmem>>, vector<1x8x128xf32>,
    return
  }
  func.func @transform_0(%arg0: i32) -> (i32, i32, i32) {
    %c0_i32 = arith.constant 0 : i32
    %c0_i32_0 = arith.constant 0 : i32
    %c0_i32_1 = arith.constant 0 : i32
    return %c0_i32, %arg0, %c0_i32_0 : i32, i32, i32
  }
  func.func @transform_1(%arg0: i32) -> (i32, i32) {
    %c0_i32 = arith.constant 0 : i32
    %c0_i32_0 = arith.constant 0 : i32
    %c0_i32_1 = arith.constant 0 : i32
    return %c0_i32, %c0_i32_0 : i32, i32
  }
  func.func @transform_2(%arg0: i32) -> i32 {
    %c0_i32 = arith.constant 0 : i32
    %c0_i32_0 = arith.constant 0 : i32
    return %c0_i32 : i32
  }
  func.func @transform_3(%arg0: i32) -> (i32, i32) {
    %c0_i32 = arith.constant 0 : i32
    %c0_i32_0 = arith.constant 0 : i32
    %c0_i32_1 = arith.constant 0 : i32
    return %c0_i32, %c0_i32_0 : i32, i32
  }
  func.func @transform_4(%arg0: i32) -> i32 {
    %c0_i32 = arith.constant 0 : i32
    %c0_i32_0 = arith.constant 0 : i32
    return %c0_i32 : i32
  }
  func.func @transform_5(%arg0: i32) -> (i32, i32, i32) {
    %c0_i32 = arith.constant 0 : i32
    %c0_i32_0 = arith.constant 0 : i32
    %c0_i32_1 = arith.constant 0 : i32
    return %c0_i32, %arg0, %c0_i32_0 : i32, i32, i32
  }
  func.func @transform_6(%arg0: i32) -> (i32, i32, i32) {
    %c0_i32 = arith.constant 0 : i32
    %c0_i32_0 = arith.constant 0 : i32
    %c0_i32_1 = arith.constant 0 : i32
    return %c0_i32, %arg0, %c0_i32_0 : i32, i32, i32
  }
}

</mosaic_0001>

<llo_original>
// kernel: tpu_custom_call.1
$region0: #{tpu_custom_call.1}
  #allocation0 [shape = 'u32[]', space=smem, size = 0x4, offset = 0x4, fixed_abs, tag = 'smem constant byte address 0x4 - core index']
  #allocation1 [shape = 'u32[144,128]{1,0:T(1,128)}', space=vmem, size = 0x12000, scoped, tag = 'internal scratch']
  %s0 = inlined_call_operand.hbm [shape: f32[2,8,128], index: 0, kind: input, shape index: {}]
  %s1 = inlined_call_operand.vmem [shape: f32[6,2], index: 1, kind: input, shape index: {}]
  %s2 = inlined_call_operand.vmem [shape: f32[6], index: 2, kind: input, shape index: {}]
  %s3 = inlined_call_operand.vmem [shape: f32[3,6], index: 3, kind: input, shape index: {}]
  %s4 = inlined_call_operand.vmem [shape: f32[3], index: 4, kind: input, shape index: {}]
  %s5 = inlined_call_operand.hbm [shape: f32[6,8,128], index: 5, kind: output, shape index: {0}]
  %s6 = inlined_call_operand.hbm [shape: f32[3,8,128], index: 6, kind: output, shape index: {1}]
  %7 = xla_tuple %s5, %s6
  %s8 = sld [smem:[#allocation0]]
  $region58: #{tpu_custom_call.1} parent=0
    _
  %s10 = ssub.s32 1, %s8
  %s11 = scalar_select 0, %s10, %s8
  $region1: #{tpu_custom_call.1} parent=0
    #allocation2 [shape = 'u8[8192]{0}', space=vmem, size = 0x2000, scoped, tag = 'input window, operand 0, single buffered']
    #allocation3 [shape = 's32[1]{0}', space=sflag, size = 0x4, scoped, tag = 'scoped memory for tpu_custom_call.1']
    #allocation4 [shape = 's32[1]{0}', space=sflag, size = 0x4, scoped, tag = 'scoped memory for tpu_custom_call.1']
    #allocation5 [shape = 's32[1]{0}', space=sflag, size = 0x4, scoped, tag = 'scoped memory for tpu_custom_call.1']
    #allocation6 [shape = 'u8[4096]{0}', space=smem, size = 0x1000, scoped, tag = 'input window, operand 1, single buffered']
    #allocation7 [shape = 'u8[512]{0}', space=smem, size = 0x200, scoped, tag = 'input window, operand 2, single buffered']
    #allocation8 [shape = 's32[1]{0}', space=sflag, size = 0x4, scoped, tag = 'scoped memory for tpu_custom_call.1']
    #allocation9 [shape = 'u8[2048]{0}', space=smem, size = 0x800, scoped, tag = 'input window, operand 3, single buffered']
    #allocation10 [shape = 'u8[512]{0}', space=smem, size = 0x200, scoped, tag = 'input window, operand 4, single buffered']
    #allocation11 [shape = 's32[1]{0}', space=sflag, size = 0x4, scoped, tag = 'scoped memory for tpu_custom_call.1']
    #allocation12 [shape = 'u8[24576]{0}', space=vmem, size = 0x6000, scoped, tag = 'output window, operand 0, single buffered']
    #allocation13 [shape = 'u8[12288]{0}', space=vmem, size = 0x3000, scoped, tag = 'output window, operand 1, single buffered']
    #allocation14 [shape = 's32[1]{0}', space=sflag, size = 0x4, scoped, tag = 'scoped memory for tpu_custom_call.1']
    %12 = vsyncpa [#allocation3], 0
    %13 = vsyncpa [#allocation5], 0
    %14 = vsyncpa [#allocation8], 0
    %15 = vsyncpa [#allocation11], 0
    %16 = vsyncpa [#allocation4], 0
    %17 = vsyncpa [#allocation14], 0
    // Predicated region
    $region2: #{tpu_custom_call.1} parent=1 // pred_check
      _
    $region3: #{tpu_custom_call.1} parent=1 // pred_check_branch
      %19 = sbr.rel (0) target = $region5
    $region4: #{tpu_custom_call.1} parent=1 // pred_region
      %s21 = ssub.s32 256, 256
      %22 = vsyncadd [#allocation3], %s21
      %s23 = sshll.u32 [#allocation2], 4
      %s24 = int_to_ptr.vmem [resolvable:$true] %s23
      %29 = dma.hbm_to_vmem [thread:$0]  %s0, 256, %s24, [#allocation3], 128, 128, 8
    $region5: #{tpu_custom_call.1} parent=1 // pred_fallthru
      _
    // Predicated region
    $region6: #{tpu_custom_call.1} parent=1 // pred_check
      _
    $region7: #{tpu_custom_call.1} parent=1 // pred_check_branch
      %31 = sbr.rel (0) target = $region9
    $region8: #{tpu_custom_call.1} parent=1 // pred_region
      %s33 = ssub.s32 128, 128
      %34 = vsyncadd [#allocation5], %s33
      %s36 = sshll.u32 %s1, 4
      %s37 = int_to_ptr.vmem [resolvable:$true] %s36
      %39 = dma.vmem_to_smem %s37, 128, [#allocation6], [#allocation5]
    $region9: #{tpu_custom_call.1} parent=1 // pred_fallthru
      _
    // Predicated region
    $region10: #{tpu_custom_call.1} parent=1 // pred_check
      _
    $region11: #{tpu_custom_call.1} parent=1 // pred_check_branch
      %41 = sbr.rel (0) target = $region13
    $region12: #{tpu_custom_call.1} parent=1 // pred_region
      %s43 = ssub.s32 16, 16
      %44 = vsyncadd [#allocation8], %s43
      %s46 = sshll.u32 %s2, 4
      %s47 = int_to_ptr.vmem [resolvable:$true] %s46
      %49 = dma.vmem_to_smem %s47, 16, [#allocation7], [#allocation8]
    $region13: #{tpu_custom_call.1} parent=1 // pred_fallthru
      _
    // Predicated region
    $region14: #{tpu_custom_call.1} parent=1 // pred_check
      _
    $region15: #{tpu_custom_call.1} parent=1 // pred_check_branch
      %51 = sbr.rel (0) target = $region17
    $region16: #{tpu_custom_call.1} parent=1 // pred_region
      %s53 = ssub.s32 64, 64
      %54 = vsyncadd [#allocation8], %s53
      %s56 = sshll.u32 %s3, 4
      %s57 = int_to_ptr.vmem [resolvable:$true] %s56
      %59 = dma.vmem_to_smem %s57, 64, [#allocation9], [#allocation8]
    $region17: #{tpu_custom_call.1} parent=1 // pred_fallthru
      _
    // Predicated region
    $region18: #{tpu_custom_call.1} parent=1 // pred_check
      _
    $region19: #{tpu_custom_call.1} parent=1 // pred_check_branch
      %61 = sbr.rel (0) target = $region21
    $region20: #{tpu_custom_call.1} parent=1 // pred_region
      %s63 = ssub.s32 16, 16
      %64 = vsyncadd [#allocation11], %s63
      %s66 = sshll.u32 %s4, 4
      %s67 = int_to_ptr.vmem [resolvable:$true] %s66
      %69 = dma.vmem_to_smem %s67, 16, [#allocation10], [#allocation11]
    $region21: #{tpu_custom_call.1} parent=1 // pred_fallthru
      _
    // Predicated region
    $region22: #{tpu_custom_call.1} parent=1 // pred_check
      _
    $region23: #{tpu_custom_call.1} parent=1 // pred_check_branch
      %71 = sbr.rel (0) target = $region25
    $region24: #{tpu_custom_call.1} parent=1 // pred_region
      %72 = dma.done [#allocation3], 256
    $region25: #{tpu_custom_call.1} parent=1 // pred_fallthru
      _
    // Predicated region
    $region26: #{tpu_custom_call.1} parent=1 // pred_check
      _
    $region27: #{tpu_custom_call.1} parent=1 // pred_check_branch
      %74 = sbr.rel (0) target = $region29
    $region28: #{tpu_custom_call.1} parent=1 // pred_region
      %75 = dma.done [#allocation5], 128
    $region29: #{tpu_custom_call.1} parent=1 // pred_fallthru
      _
    // Predicated region
    $region30: #{tpu_custom_call.1} parent=1 // pred_check
      _
    $region31: #{tpu_custom_call.1} parent=1 // pred_check_branch
      %77 = sbr.rel (0) target = $region33
    $region32: #{tpu_custom_call.1} parent=1 // pred_region
      %78 = dma.done [#allocation8], 16
    $region33: #{tpu_custom_call.1} parent=1 // pred_fallthru
      _
    // Predicated region
    $region34: #{tpu_custom_call.1} parent=1 // pred_check
      _
    $region35: #{tpu_custom_call.1} parent=1 // pred_check_branch
      %80 = sbr.rel (0) target = $region37
    $region36: #{tpu_custom_call.1} parent=1 // pred_region
      %81 = dma.done [#allocation8], 64
    $region37: #{tpu_custom_call.1} parent=1 // pred_fallthru
      _
    // Predicated region
    $region38: #{tpu_custom_call.1} parent=1 // pred_check
      _
    $region39: #{tpu_custom_call.1} parent=1 // pred_check_branch
      %83 = sbr.rel (0) target = $region41
    $region40: #{tpu_custom_call.1} parent=1 // pred_region
      %84 = dma.done [#allocation11], 16
    $region41: #{tpu_custom_call.1} parent=1 // pred_fallthru
      _
    %85 = sfence
    %v86 = vld [vmem:[#allocation2] sm:$0xff]
    %s87 = scalar_lea.vmem [#allocation2], 8
    %v88 = vld [vmem:[%s87] sm:$0xff]
    %s89 = sld [smem:[#allocation6]]
    %v90 = vstv %s89
    %v91 = vmul.f32 %v90, %v86
    %s92 = sld [smem:[#allocation6 + $0x1]]
    %v93 = vstv %s92
    %v94 = vmul.f32 %v93, %v88
    %v95 = vadd.f32 %v91, %v94
    %s96 = sld [smem:[#allocation7]]
    %v97 = vstv %s96
    %v98 = vadd.f32 %v95, %v97
    %99 = vst [vmem:[#allocation12] sm:$0xff] %v98
    %vm100 = vcmp.gt.f32.partialorder %v98, 0.0
    %v101 = vmul.f32 %v98, 0.2
    %v102 = vsel %vm100, %v98, %v101
    %s103 = sld [smem:[#allocation6 + $0x80]]
    %v104 = vstv %s103
    %v105 = vmul.f32 %v104, %v86
    %s106 = sld [smem:[#allocation6 + $0x81]]
    %v107 = vstv %s106
    %v108 = vmul.f32 %v107, %v88
    %v109 = vadd.f32 %v105, %v108
    %s110 = sld [smem:[#allocation7 + $0x1]]
    %v111 = vstv %s110
    %v112 = vadd.f32 %v109, %v111
    %s113 = scalar_lea.vmem [#allocation12], 8
    %114 = vst [vmem:[%s113] sm:$0xff] %v112
    %vm115 = vcmp.gt.f32.partialorder %v112, 0.0
    %v116 = vmul.f32 %v112, 0.2
    %v117 = vsel %vm115, %v112, %v116
    %s118 = sld [smem:[#allocation6 + $0x100]]
    %v119 = vstv %s118
    %v120 = vmul.f32 %v119, %v86
    %s121 = sld [smem:[#allocation6 + $0x101]]
    %v122 = vstv %s121
    %v123 = vmul.f32 %v122, %v88
    %v124 = vadd.f32 %v120, %v123
    %s125 = sld [smem:[#allocation7 + $0x2]]
    %v126 = vstv %s125
    %v127 = vadd.f32 %v124, %v126
    %s128 = scalar_lea.vmem [#allocation12], 16
    %129 = vst [vmem:[%s128] sm:$0xff] %v127
    %vm130 = vcmp.gt.f32.partialorder %v127, 0.0
    %v131 = vmul.f32 %v127, 0.2
    %v132 = vsel %vm130, %v127, %v131
    %s133 = sld [smem:[#allocation6 + $0x180]]
    %v134 = vstv %s133
    %v135 = vmul.f32 %v134, %v86
    %s136 = sld [smem:[#allocation6 + $0x181]]
    %v137 = vstv %s136
    %v138 = vmul.f32 %v137, %v88
    %v139 = vadd.f32 %v135, %v138
    %s140 = sld [smem:[#allocation7 + $0x3]]
    %v141 = vstv %s140
    %v142 = vadd.f32 %v139, %v141
    %s143 = scalar_lea.vmem [#allocation12], 24
    %144 = vst [vmem:[%s143] sm:$0xff] %v142
    %vm145 = vcmp.gt.f32.partialorder %v142, 0.0
    %v146 = vmul.f32 %v142, 0.2
    %v147 = vsel %vm145, %v142, %v146
    %s148 = sld [smem:[#allocation6 + $0x200]]
    %v149 = vstv %s148
    %v150 = vmul.f32 %v149, %v86
    %s151 = sld [smem:[#allocation6 + $0x201]]
    %v152 = vstv %s151
    %v153 = vmul.f32 %v152, %v88
    %v154 = vadd.f32 %v150, %v153
    %s155 = sld [smem:[#allocation7 + $0x4]]
    %v156 = vstv %s155
    %v157 = vadd.f32 %v154, %v156
    %s158 = scalar_lea.vmem [#allocation12], 32
    %159 = vst [vmem:[%s158] sm:$0xff] %v157
    %vm160 = vcmp.gt.f32.partialorder %v157, 0.0
    %v161 = vmul.f32 %v157, 0.2
    %v162 = vsel %vm160, %v157, %v161
    %s163 = sld [smem:[#allocation6 + $0x280]]
    %v164 = vstv %s163
    %v165 = vmul.f32 %v164, %v86
    %s166 = sld [smem:[#allocation6 + $0x281]]
    %v167 = vstv %s166
    %v168 = vmul.f32 %v167, %v88
    %v169 = vadd.f32 %v165, %v168
    %s170 = sld [smem:[#allocation7 + $0x5]]
    %v171 = vstv %s170
    %v172 = vadd.f32 %v169, %v171
    %s173 = scalar_lea.vmem [#allocation12], 40
    %174 = vst [vmem:[%s173] sm:$0xff] %v172
    %vm175 = vcmp.gt.f32.partialorder %v172, 0.0
    %v176 = vmul.f32 %v172, 0.2
    %v177 = vsel %vm175, %v172, %v176
    %s178 = sld [smem:[#allocation9]]
    %v179 = vstv %s178
    %v180 = vmul.f32 %v179, %v102
    %s181 = sld [smem:[#allocation10]]
    %v182 = vstv %s181
    %v183 = vadd.f32 %v180, %v182
    %s184 = sld [smem:[#allocation9 + $0x1]]
    %v185 = vstv %s184
    %v186 = vmul.f32 %v185, %v117
    %v187 = vadd.f32 %v183, %v186
    %s188 = sld [smem:[#allocation9 + $0x2]]
    %v189 = vstv %s188
    %v190 = vmul.f32 %v189, %v132
    %v191 = vadd.f32 %v187, %v190
    %s192 = sld [smem:[#allocation9 + $0x3]]
    %v193 = vstv %s192
    %v194 = vmul.f32 %v193, %v147
    %v195 = vadd.f32 %v191, %v194
    %s196 = sld [smem:[#allocation9 + $0x4]]
    %v197 = vstv %s196
    %v198 = vmul.f32 %v197, %v162
    %v199 = vadd.f32 %v195, %v198
    %s200 = sld [smem:[#allocation9 + $0x5]]
    %v201 = vstv %s200
    %v202 = vmul.f32 %v201, %v177
    %v203 = vadd.f32 %v199, %v202
    %204 = vst [vmem:[#allocation13] sm:$0xff] %v203
    %s205 = sld [smem:[#allocation9 + $0x80]]
    %v206 = vstv %s205
    %v207 = vmul.f32 %v206, %v102
    %s208 = sld [smem:[#allocation10 + $0x1]]
    %v209 = vstv %s208
    %v210 = vadd.f32 %v207, %v209
    %s211 = sld [smem:[#allocation9 + $0x81]]
    %v212 = vstv %s211
    %v213 = vmul.f32 %v212, %v117
    %v214 = vadd.f32 %v210, %v213
    %s215 = sld [smem:[#allocation9 + $0x82]]
    %v216 = vstv %s215
    %v217 = vmul.f32 %v216, %v132
    %v218 = vadd.f32 %v214, %v217
    %s219 = sld [smem:[#allocation9 + $0x83]]
    %v220 = vstv %s219
    %v221 = vmul.f32 %v220, %v147
    %v222 = vadd.f32 %v218, %v221
    %s223 = sld [smem:[#allocation9 + $0x84]]
    %v224 = vstv %s223
    %v225 = vmul.f32 %v224, %v162
    %v226 = vadd.f32 %v222, %v225
    %s227 = sld [smem:[#allocation9 + $0x85]]
    %v228 = vstv %s227
    %v229 = vmul.f32 %v228, %v177
    %v230 = vadd.f32 %v226, %v229
    %s231 = scalar_lea.vmem [#allocation13], 8
    %232 = vst [vmem:[%s231] sm:$0xff] %v230
    %s233 = sld [smem:[#allocation9 + $0x100]]
    %v234 = vstv %s233
    %v235 = vmul.f32 %v234, %v102
    %s236 = sld [smem:[#allocation10 + $0x2]]
    %v237 = vstv %s236
    %v238 = vadd.f32 %v235, %v237
    %s239 = sld [smem:[#allocation9 + $0x101]]
    %v240 = vstv %s239
    %v241 = vmul.f32 %v240, %v117
    %v242 = vadd.f32 %v238, %v241
    %s243 = sld [smem:[#allocation9 + $0x102]]
    %v244 = vstv %s243
    %v245 = vmul.f32 %v244, %v132
    %v246 = vadd.f32 %v242, %v245
    %s247 = sld [smem:[#allocation9 + $0x103]]
    %v248 = vstv %s247
    %v249 = vmul.f32 %v248, %v147
    %v250 = vadd.f32 %v246, %v249
    %s251 = sld [smem:[#allocation9 + $0x104]]
    %v252 = vstv %s251
    %v253 = vmul.f32 %v252, %v162
    %v254 = vadd.f32 %v250, %v253
    %s255 = sld [smem:[#allocation9 + $0x105]]
    %v256 = vstv %s255
    %v257 = vmul.f32 %v256, %v177
    %v258 = vadd.f32 %v254, %v257
    %s259 = scalar_lea.vmem [#allocation13], 16
    %260 = vst [vmem:[%s259] sm:$0xff] %v258
    // Predicated region
    $region42: #{tpu_custom_call.1} parent=1 // pred_check
      _
    $region43: #{tpu_custom_call.1} parent=1 // pred_check_branch
      %262 = sbr.rel (0) target = $region45
    $region44: #{tpu_custom_call.1} parent=1 // pred_region
      %s264 = ssub.s32 768, 768
      %265 = vsyncadd [#allocation4], %s264
      %s266 = sshll.u32 [#allocation12], 4
      %s267 = int_to_ptr.vmem [resolvable:$true] %s266
      %272 = dma.vmem_to_hbm [thread:$0]  %s267, 768, %s5, [#allocation4], 128, 128, 8
    $region45: #{tpu_custom_call.1} parent=1 // pred_fallthru
      _
    // Predicated region
    $region46: #{tpu_custom_call.1} parent=1 // pred_check
      _
    $region47: #{tpu_custom_call.1} parent=1 // pred_check_branch
      %274 = sbr.rel (0) target = $region49
    $region48: #{tpu_custom_call.1} parent=1 // pred_region
      %s276 = ssub.s32 384, 384
      %277 = vsyncadd [#allocation14], %s276
      %s278 = sshll.u32 [#allocation13], 4
      %s279 = int_to_ptr.vmem [resolvable:$true] %s278
      %284 = dma.vmem_to_hbm [thread:$0]  %s279, 384, %s6, [#allocation14], 128, 128, 8
    $region49: #{tpu_custom_call.1} parent=1 // pred_fallthru
      _
    // Predicated region
    $region50: #{tpu_custom_call.1} parent=1 // pred_check
      _
    $region51: #{tpu_custom_call.1} parent=1 // pred_check_branch
      %286 = sbr.rel (0) target = $region53
    $region52: #{tpu_custom_call.1} parent=1 // pred_region
      %287 = dma.done [#allocation4], 768
    $region53: #{tpu_custom_call.1} parent=1 // pred_fallthru
      _
    // Predicated region
    $region54: #{tpu_custom_call.1} parent=1 // pred_check
      _
    $region55: #{tpu_custom_call.1} parent=1 // pred_check_branch
      %289 = sbr.rel (0) target = $region57
    $region56: #{tpu_custom_call.1} parent=1 // pred_region
      %290 = dma.done [#allocation14], 384
    $region57: #{tpu_custom_call.1} parent=1 // pred_fallthru
      _
    %291 = vsyncpa [#allocation3], 1
    %292 = vsyncpa [#allocation4], 1
    %293 = vsyncpa [#allocation14], 1
    %294 = vsyncpa [#allocation5], 1
    %295 = vsyncpa [#allocation8], 1
    %296 = vsyncpa [#allocation11], 1

</llo_original>
